<compile_context>
chip_gen: v7x
topology: tpu7x:2x2x1
jax: 0.10.0
libtpu: 0.0.40
codegen_flags: <defaults>
</compile_context>

<pallas_src>
import jax
import jax.numpy as jnp
from jax import lax
from jax.experimental import pallas as pl
from jax.experimental.pallas import tpu as pltpu


def _make_seg_xe_kernel(classes, t_sub, npix, n_tiles, tiles_per_split,
                        need_mask, clamp_needed, exp_dtype):
    """Fused weighted-XE kernel for a fixed static configuration."""
    nc = classes + 1
    px_shape = (t_sub, 128)

    def kernel(w_ref, pred_ref, *rest):
        # arg layout: scalar-prefetch weights (SMEM), predictions, `classes` target
        # refs, 2 outputs (per-(batch, split) partial num/den), 2 VMEM accumulators.
        t_refs = rest[:classes]
        num_out, den_out = rest[classes], rest[classes + 1]
        num_acc, den_acc = rest[classes + 2], rest[classes + 3]

        t = pl.program_id(2)            # pixel-tile axis: MUST stay "arbitrary"
        n_t = pl.num_programs(2)        # (scratch accumulators are reused across it)

        @pl.when(t == 0)
        def _():
            num_acc[...] = jnp.zeros_like(num_acc)
            den_acc[...] = jnp.zeros_like(den_acc)

        # --- semantic target map (streaming over the `classes` mask refs) ----------
        # PyTorch: c_target = classes - argmax(stack([t_{c-1},...,t_0, ones]), dim=1)
        # The ones plane is synthesized as the constant 1.0; the background wins only
        # when no target reaches the per-pixel max, which reproduces torch.argmax
        # first-occurrence tie-breaking exactly:
        #   c_target = max_j ( (j+1) if t_j == max(max_j t_j, 1) else 0 )
        tmax = jnp.full(px_shape, 1.0, jnp.float32)
        for j in range(classes):
            tmax = jnp.maximum(tmax, t_refs[j][...].astype(jnp.float32))
        c_target = jnp.zeros(px_shape, jnp.int32)
        for j in range(classes):
            hit = t_refs[j][...].astype(jnp.float32) == tmax
            c_target = jnp.maximum(c_target, jnp.where(hit, j + 1, 0))

        # --- streaming per-pixel weighted softmax cross entropy --------------------
        # Never materialize the full (nc, T, 128) logits block: read each class plane
        # from the ref (vld has slack), keeping the live set small (less spill).
        lmax = pred_ref[0].astype(jnp.float32)
        for c in range(1, nc):
            lmax = jnp.maximum(lmax, pred_ref[c].astype(jnp.float32))

        sumexp = jnp.zeros(px_shape, jnp.float32)
        sel = jnp.zeros(px_shape, jnp.float32)      # logit of the target class
        w_t = jnp.zeros(px_shape, jnp.float32)      # per-pixel class weight
        for c in range(nc):                         # nc is small & static
            lc = pred_ref[c].astype(jnp.float32)
            x = lc - lmax
            if exp_dtype is not None and exp_dtype != jnp.float32:
                # optional bf16 exp (v6e/v7x EUP); keep f32 accumulation
                e = jnp.exp(x.astype(exp_dtype)).astype(jnp.float32)
            else:
                e = jnp.exp(x)
            hit = c_target == c
            sumexp = sumexp + e
            sel = sel + jnp.where(hit, lc, 0.0)
            w_t = w_t + jnp.where(hit, w_ref[c], 0.0)   # w_ref[c]: SMEM scalar

        nll = (lmax + jnp.log(sumexp)) - sel
        num_c = w_t * nll
        den_c = w_t

        if need_mask:
            # Only edge tiles (genuine last tile / clamped duplicate tiles of a
            # parallel split) can hold out-of-range pixels; interior tiles skip the
            # masking cost entirely.
            tile_id = pl.program_id(1) * tiles_per_split + t
            is_edge = tile_id >= (n_tiles - 1)

            @pl.when(is_edge)
            def _():
                eff = jnp.minimum(tile_id, n_tiles - 1) if clamp_needed else tile_id
                row = lax.broadcasted_iota(jnp.int32, px_shape, 0)
                lane = lax.broadcasted_iota(jnp.int32, px_shape, 1)
                pix = (eff * t_sub + row) * 128 + lane
                valid = pix < npix
                if clamp_needed:
                    valid = jnp.logical_and(valid, tile_id < n_tiles)
                # Mask BEFORE accumulating: padded / out-of-bounds pixels may carry
                # Inf/NaN from exp/log on unspecified data.
                num_acc[...] = num_acc[...] + jnp.where(valid, num_c, 0.0)
                den_acc[...] = den_acc[...] + jnp.where(valid, den_c, 0.0)

            @pl.when(jnp.logical_not(is_edge))
            def _():
                num_acc[...] = num_acc[...] + num_c
                den_acc[...] = den_acc[...] + den_c
        else:
            num_acc[...] = num_acc[...] + num_c
            den_acc[...] = den_acc[...] + den_c

        @pl.when(t == n_t - 1)
        def _():
            num_out[...] = jnp.sum(num_acc[...], keepdims=True)   # (1, 1)
            den_out[...] = jnp.sum(den_acc[...], keepdims=True)   # (1, 1)

    return kernel


def segmentation_loss(predictions, targets, classes,
                      loss_for_background=True, w_l=None, l_xe=1.0, l_dice=0.0,
                      force_semantic=True, sub_tile=None, exp_dtype=None):
    """JAX/Pallas port of SegmentationLoss.forward (default config: l_dice=0)."""
    if not loss_for_background:
        raise NotImplementedError  # TODO(synk): loss_for_background=False path
    if not force_semantic:
        raise NotImplementedError  # mirrors the PyTorch module
    if l_dice != 0.0:
        raise NotImplementedError  # TODO(synk): DICE branch (disabled by default)

    B, C, H, W = predictions.shape
    nc = classes + 1
    if nc != C:
        raise ValueError(
            f"de facto classes ({nc}) must equal prediction channels ({C})")
    if len(targets) != classes:
        raise ValueError("expected `classes` target masks")
    if w_l is None:
        w_l = jnp.ones((nc,), jnp.float32)
    w_l = jnp.asarray(w_l, jnp.float32).reshape(nc)

    # ---- lane-dense flattening of the spatial dims -----------------------------
    # (B, C, H, W) -> (B, C, np_sub, 128): free reshape; pad-copy only when H*W is
    # not a multiple of 128 (padded pixels are masked out in-kernel).
    npix = H * W
    npix_pad = ((npix + 127) // 128) * 128
    np_sub = npix_pad // 128

    def _flatten(a, lead):
        a = a.reshape(lead + (npix,))
        if npix_pad != npix:
            a = jnp.pad(a, [(0, 0)] * len(lead) + [(0, npix_pad - npix)])
        return a.reshape(lead + (np_sub, 128))

    preds4 = _flatten(predictions, (B, C))
    tgts3 = [_flatten(t, (B,)) for t in targets]

    # ---- tile selection & VMEM budget -------------------------------------------
    p_is = predictions.dtype.itemsize
    t_is = targets[0].dtype.itemsize
    sub_mult = {4: 8, 2: 16, 1: 32}.get(min(p_is, t_is), 8)

    if sub_tile is None:
        # ~128K pixels/step, capped so double-buffered inputs + f32 accumulators +
        # elementwise temporaries stay within a budget safe on every generation
        # (v5e 128 MiB phys / 16 MiB scoped default, v6e 128/32, v7x 64/32).
        row_bytes = (2 * (nc * p_is + classes * t_is) + 2 * 4 + 16 * 4) * 128
        max_rows = max(sub_mult, (20 << 20) // row_bytes)
        t_sub = min(np_sub, 1024, max_rows)
    else:
        t_sub = min(int(sub_tile), np_sub)
    if t_sub < np_sub:
        t_sub = (t_sub // sub_mult) * sub_mult
        if t_sub == 0:
            t_sub = np_sub

    n_tiles = int(pl.cdiv(np_sub, t_sub))

    # v7x has 2 TensorCores: if the batch axis cannot feed both, split the pixel
    # tiles into 2 "parallel" chunks with separate partial outputs (summed below).
    n_par = 2 if (B == 1 and n_tiles >= 2) else 1
    tiles_per_split = int(pl.cdiv(n_tiles, n_par))
    clamp_needed = n_par * tiles_per_split > n_tiles
    need_mask = (npix_pad != npix) or (np_sub % t_sub != 0) or clamp_needed

    kernel = _make_seg_xe_kernel(classes, t_sub, npix, n_tiles, tiles_per_split,
                                 need_mask, clamp_needed, exp_dtype)

    if clamp_needed:
        def _pix_block(p, t):
            return jnp.minimum(p * tiles_per_split + t, n_tiles - 1)
    else:
        def _pix_block(p, t):
            return p * tiles_per_split + t

    in_specs = [
        # NCHW-flattened predictions in place: (b) squeezed, full C, (t_sub, 128).
        pl.BlockSpec((pl.Squeezed(), nc, t_sub, 128),
                     lambda b, p, t, w_sm: (b, 0, _pix_block(p, t), 0)),
    ] + [
        # each binary target mask as its own ref — no stacked copy, no ones plane.
        pl.BlockSpec((pl.Squeezed(), t_sub, 128),
                     lambda b, p, t, w_sm: (b, _pix_block(p, t), 0))
        for _ in range(classes)
    ]
    out_specs = [
        pl.BlockSpec((pl.Squeezed(), 1, 1),
                     lambda b, p, t, w_sm: (b * n_par + p, 0, 0)),
        pl.BlockSpec((pl.Squeezed(), 1, 1),
                     lambda b, p, t, w_sm: (b * n_par + p, 0, 0)),
    ]

    tile_bytes = t_sub * 128 * 4
    vmem_need = (2 * (nc * p_is + classes * t_is) * t_sub * 128   # double-buffered in
                 + 2 * tile_bytes                                  # f32 accumulators
                 + 16 * tile_bytes)                                # temporaries headroom
    vmem_limit = int(min(max(vmem_need + (8 << 20), 32 << 20), 44 << 20))

    cost = pl.CostEstimate(
        flops=int(B * npix * (6 * nc + 4 * classes + 8)),
        transcendentals=int(B * npix * (nc + 1)),
        bytes_accessed=int(B * npix_pad * (nc * p_is + classes * t_is)
                           + B * n_par * 2 * 4 + nc * 4),
    )

    num_out, den_out = pl.pallas_call(
        kernel,
        out_shape=(jax.ShapeDtypeStruct((B * n_par, 1, 1), jnp.float32),
                   jax.ShapeDtypeStruct((B * n_par, 1, 1), jnp.float32)),
        grid_spec=pltpu.PrefetchScalarGridSpec(
            num_scalar_prefetch=1,                 # class weights -> SMEM
            grid=(B, n_par, tiles_per_split),      # (parallel, parallel, reduce)
            in_specs=in_specs,
            out_specs=out_specs,
            scratch_shapes=[pltpu.VMEM((t_sub, 128), jnp.float32),   # numerator
                            pltpu.VMEM((t_sub, 128), jnp.float32)],  # denominator
        ),
        compiler_params=pltpu.CompilerParams(
            dimension_semantics=("parallel", "parallel", "arbitrary"),
            vmem_limit_bytes=vmem_limit),
        cost_estimate=cost,
    )(w_l, preds4, *tgts3)

    # CrossEntropyLoss(weight=w, reduction='mean') == sum(w[t]*nll) / sum(w[t])
    return jnp.sum(num_out) / jnp.sum(den_out)


def _reference_loss(predictions, targets, classes, w_l=None):
    """Pure-JAX mirror of the PyTorch forward (default l_dice=0)."""
    B, C, H, W = predictions.shape
    nc = classes + 1
    if w_l is None:
        w_l = jnp.ones((nc,), jnp.float32)
    all_t = [jnp.ones_like(targets[0])] + list(targets)
    stacked = jnp.stack(all_t[::-1], axis=1)                 # (B, nc, H, W)
    c_t = classes - jnp.argmax(stacked, axis=1)              # (B, H, W)
    logits = jnp.moveaxis(predictions, 1, -1).reshape(-1, C).astype(jnp.float32)
    logp = jax.nn.log_softmax(logits, axis=-1)
    t = c_t.reshape(-1)
    nll = -jnp.take_along_axis(logp, t[:, None], axis=-1)[:, 0]
    w = jnp.asarray(w_l, jnp.float32)[t]
    return jnp.sum(w * nll) / jnp.sum(w)


if __name__ == "__main__":
    key = jax.random.PRNGKey(0)

    # --- test 1: module defaults, B>1, H*W multiple of 128 (no mask path) ---------
    B, classes, H, W = 2, 4, 16, 16          # predictions have classes+1 = 5 channels
    C = classes + 1
    kp, kt = jax.random.split(key)
    predictions = jax.random.normal(kp, (B, C, H, W), dtype=jnp.float32)
    tkeys = jax.random.split(kt, classes)
    targets = [(jax.random.uniform(tkeys[i], (B, H, W)) > 0.5).astype(jnp.float32)
               for i in range(classes)]
    loss = jax.block_until_ready(segmentation_loss(predictions, targets, classes))
    ref = _reference_loss(predictions, targets, classes)
    assert jnp.allclose(loss, ref, atol=1e-5, rtol=1e-5), (float(loss), float(ref))

    # --- test 2: non-uniform weights, H*W not a multiple of 128 (pad + edge mask) --
    B2, classes2, H2, W2 = 1, 3, 20, 16
    C2 = classes2 + 1
    kp2, kt2 = jax.random.split(jax.random.PRNGKey(1))
    preds2 = jax.random.normal(kp2, (B2, C2, H2, W2), dtype=jnp.float32)
    tkeys2 = jax.random.split(kt2, classes2)
    targets2 = [(jax.random.uniform(tkeys2[i], (B2, H2, W2)) > 0.5).astype(jnp.float32)
                for i in range(classes2)]
    w2 = jnp.array([1.0, 2.0, 0.5, 3.0], jnp.float32)
    loss2 = jax.block_until_ready(
        segmentation_loss(preds2, targets2, classes2, w_l=w2))
    ref2 = _reference_loss(preds2, targets2, classes2, w_l=w2)
    assert jnp.allclose(loss2, ref2, atol=1e-5, rtol=1e-5), (float(loss2), float(ref2))

    # --- test 3: B=1, multi-tile -> 2-way parallel pixel split (v7x path), partial
    # last tile and a clamped duplicate tile on the second split ------------------
    B3, classes3, H3, W3 = 1, 2, 40, 128
    C3 = classes3 + 1
    kp3, kt3 = jax.random.split(jax.random.PRNGKey(2))
    preds3 = jax.random.normal(kp3, (B3, C3, H3, W3), dtype=jnp.float32)
    tkeys3 = jax.random.split(kt3, classes3)
    targets3 = [(jax.random.uniform(tkeys3[i], (B3, H3, W3)) > 0.5).astype(jnp.float32)
                for i in range(classes3)]
    loss3 = jax.block_until_ready(
        segmentation_loss(preds3, targets3, classes3, sub_tile=16))
    ref3 = _reference_loss(preds3, targets3, classes3)
    assert jnp.allclose(loss3, ref3, atol=1e-5, rtol=1e-5), (float(loss3), float(ref3))

    print("KERNEL_OK")
</pallas_src>

<mosaic_0001>
module attributes {stable_mosaic.version = 11 : i64} {
  func.func @kernel(%arg0: i32, %arg1: i32, %arg2: i32, %arg3: memref<5xf32, #tpu.memory_space<smem>>, %arg4: memref<1x5x2x128xf32, #tpu.memory_space<vmem>>, %arg5: memref<1x2x128xf32, #tpu.memory_space<vmem>>, %arg6: memref<1x2x128xf32, #tpu.memory_space<vmem>>, %arg7: memref<1x2x128xf32, #tpu.memory_space<vmem>>, %arg8: memref<1x2x128xf32, #tpu.memory_space<vmem>>, %arg9: memref<1x1x1xf32, #tpu.memory_space<vmem>>, %arg10: memref<1x1x1xf32, #tpu.memory_space<vmem>>, %arg11: memref<2x128xf32, #tpu.memory_space<vmem>>, %arg12: memref<2x128xf32, #tpu.memory_space<vmem>>) attributes {dimension_semantics = [#tpu.dimension_semantics<parallel>, #tpu.dimension_semantics<parallel>, #tpu.dimension_semantics<arbitrary>], iteration_bounds = array<i64: 2, 1, 1>, scalar_prefetch = 1 : i64, scratch_operands = 2 : i64, tpu.core_type = #tpu.core_type<tc>, window_params = [{transform_indices = @transform_0, window_bounds = array<i64: 1, 5, 2, 128>}, {transform_indices = @transform_1, window_bounds = array<i64: 1, 2, 128>}, {transform_indices = @transform_2, window_bounds = array<i64: 1, 2, 128>}, {transform_indices = @transform_3, window_bounds = array<i64: 1, 2, 128>}, {transform_indices = @transform_4, window_bounds = array<i64: 1, 2, 128>}, {transform_indices = @transform_5, window_bounds = array<i64: 1, 1, 1>}, {transform_indices = @transform_6, window_bounds = array<i64: 1, 1, 1>}]} {
    %c0_i32 = arith.constant 0 : i32
    %0 = arith.cmpi eq, %arg2, %c0_i32 : i32
    %1 = arith.extui %0 : i1 to i32
    %c0_i32_0 = arith.constant 0 : i32
    %2 = arith.cmpi ne, %1, %c0_i32_0 : i32
    scf.if %2 {
      %cst_98 = arith.constant 0.000000e+00 : f32
      %150 = vector.broadcast %cst_98 : f32 to vector<2x128xf32>
      %c0_99 = arith.constant 0 : index
      %c0_100 = arith.constant 0 : index
      %151 = vector.load %arg11[%c0_99, %c0_100] : memref<2x128xf32, #tpu.memory_space<vmem>>, vector<2x128xf32>
      tpu.vector_store %arg11[%c0_99, %c0_100], %150 {strides = array<i32>} : memref<2x128xf32, #tpu.memory_space<vmem>>, vector<2x128xf32>,
      %cst_101 = arith.constant 0.000000e+00 : f32
      %152 = vector.broadcast %cst_101 : f32 to vector<2x128xf32>
      %c0_102 = arith.constant 0 : index
      %c0_103 = arith.constant 0 : index
      %153 = vector.load %arg12[%c0_102, %c0_103] : memref<2x128xf32, #tpu.memory_space<vmem>>, vector<2x128xf32>
      tpu.vector_store %arg12[%c0_102, %c0_103], %152 {strides = array<i32>} : memref<2x128xf32, #tpu.memory_space<vmem>>, vector<2x128xf32>,
    } else {
    }
    %cst = arith.constant 1.000000e+00 : f32
    %3 = vector.broadcast %cst : f32 to vector<2x128xf32>
    %c0 = arith.constant 0 : index
    %c0_1 = arith.constant 0 : index
    %c0_2 = arith.constant 0 : index
    %4 = vector.load %arg5[%c0, %c0_1, %c0_2] : memref<1x2x128xf32, #tpu.memory_space<vmem>>, vector<1x2x128xf32>
    %5 = vector.shape_cast %4 : vector<1x2x128xf32> to vector<2x128xf32>
    %6 = arith.maximumf %3, %5 : vector<2x128xf32>
    %c0_3 = arith.constant 0 : index
    %c0_4 = arith.constant 0 : index
    %c0_5 = arith.constant 0 : index
    %7 = vector.load %arg6[%c0_3, %c0_4, %c0_5] : memref<1x2x128xf32, #tpu.memory_space<vmem>>, vector<1x2x128xf32>
    %8 = vector.shape_cast %7 : vector<1x2x128xf32> to vector<2x128xf32>
    %9 = arith.maximumf %6, %8 : vector<2x128xf32>
    %c0_6 = arith.constant 0 : index
    %c0_7 = arith.constant 0 : index
    %c0_8 = arith.constant 0 : index
    %10 = vector.load %arg7[%c0_6, %c0_7, %c0_8] : memref<1x2x128xf32, #tpu.memory_space<vmem>>, vector<1x2x128xf32>
    %11 = vector.shape_cast %10 : vector<1x2x128xf32> to vector<2x128xf32>
    %12 = arith.maximumf %9, %11 : vector<2x128xf32>
    %c0_9 = arith.constant 0 : index
    %c0_10 = arith.constant 0 : index
    %c0_11 = arith.constant 0 : index
    %13 = vector.load %arg8[%c0_9, %c0_10, %c0_11] : memref<1x2x128xf32, #tpu.memory_space<vmem>>, vector<1x2x128xf32>
    %14 = vector.shape_cast %13 : vector<1x2x128xf32> to vector<2x128xf32>
    %15 = arith.maximumf %12, %14 : vector<2x128xf32>
    %c0_i32_12 = arith.constant 0 : i32
    %16 = vector.broadcast %c0_i32_12 : i32 to vector<2x128xi32>
    %c0_13 = arith.constant 0 : index
    %c0_14 = arith.constant 0 : index
    %c0_15 = arith.constant 0 : index
    %17 = vector.load %arg5[%c0_13, %c0_14, %c0_15] : memref<1x2x128xf32, #tpu.memory_space<vmem>>, vector<1x2x128xf32>
    %18 = vector.shape_cast %17 : vector<1x2x128xf32> to vector<2x128xf32>
    %19 = arith.cmpf oeq, %18, %15 : vector<2x128xf32>
    %c1_i32 = arith.constant 1 : i32
    %c0_i32_16 = arith.constant 0 : i32
    %20 = vector.broadcast %c1_i32 : i32 to vector<2x128xi32>
    %21 = vector.broadcast %c0_i32_16 : i32 to vector<2x128xi32>
    %22 = arith.select %19, %20, %21 : vector<2x128xi1>, vector<2x128xi32>
    %23 = arith.maxsi %16, %22 : vector<2x128xi32>
    %c0_17 = arith.constant 0 : index
    %c0_18 = arith.constant 0 : index
    %c0_19 = arith.constant 0 : index
    %24 = vector.load %arg6[%c0_17, %c0_18, %c0_19] : memref<1x2x128xf32, #tpu.memory_space<vmem>>, vector<1x2x128xf32>
    %25 = vector.shape_cast %24 : vector<1x2x128xf32> to vector<2x128xf32>
    %26 = arith.cmpf oeq, %25, %15 : vector<2x128xf32>
    %c2_i32 = arith.constant 2 : i32
    %c0_i32_20 = arith.constant 0 : i32
    %27 = vector.broadcast %c2_i32 : i32 to vector<2x128xi32>
    %28 = vector.broadcast %c0_i32_20 : i32 to vector<2x128xi32>
    %29 = arith.select %26, %27, %28 : vector<2x128xi1>, vector<2x128xi32>
    %30 = arith.maxsi %23, %29 : vector<2x128xi32>
    %c0_21 = arith.constant 0 : index
    %c0_22 = arith.constant 0 : index
    %c0_23 = arith.constant 0 : index
    %31 = vector.load %arg7[%c0_21, %c0_22, %c0_23] : memref<1x2x128xf32, #tpu.memory_space<vmem>>, vector<1x2x128xf32>
    %32 = vector.shape_cast %31 : vector<1x2x128xf32> to vector<2x128xf32>
    %33 = arith.cmpf oeq, %32, %15 : vector<2x128xf32>
    %c3_i32 = arith.constant 3 : i32
    %c0_i32_24 = arith.constant 0 : i32
    %34 = vector.broadcast %c3_i32 : i32 to vector<2x128xi32>
    %35 = vector.broadcast %c0_i32_24 : i32 to vector<2x128xi32>
    %36 = arith.select %33, %34, %35 : vector<2x128xi1>, vector<2x128xi32>
    %37 = arith.maxsi %30, %36 : vector<2x128xi32>
    %c0_25 = arith.constant 0 : index
    %c0_26 = arith.constant 0 : index
    %c0_27 = arith.constant 0 : index
    %38 = vector.load %arg8[%c0_25, %c0_26, %c0_27] : memref<1x2x128xf32, #tpu.memory_space<vmem>>, vector<1x2x128xf32>
    %39 = vector.shape_cast %38 : vector<1x2x128xf32> to vector<2x128xf32>
    %40 = arith.cmpf oeq, %39, %15 : vector<2x128xf32>
    %c4_i32 = arith.constant 4 : i32
    %c0_i32_28 = arith.constant 0 : i32
    %41 = vector.broadcast %c4_i32 : i32 to vector<2x128xi32>
    %42 = vector.broadcast %c0_i32_28 : i32 to vector<2x128xi32>
    %43 = arith.select %40, %41, %42 : vector<2x128xi1>, vector<2x128xi32>
    %44 = arith.maxsi %37, %43 : vector<2x128xi32>
    %c0_29 = arith.constant 0 : index
    %c0_30 = arith.constant 0 : index
    %c0_31 = arith.constant 0 : index
    %c0_32 = arith.constant 0 : index
    %45 = vector.load %arg4[%c0_29, %c0_30, %c0_31, %c0_32] : memref<1x5x2x128xf32, #tpu.memory_space<vmem>>, vector<1x1x2x128xf32>
    %46 = vector.shape_cast %45 : vector<1x1x2x128xf32> to vector<2x128xf32>
    %c0_33 = arith.constant 0 : index
    %c1 = arith.constant 1 : index
    %c0_34 = arith.constant 0 : index
    %c0_35 = arith.constant 0 : index
    %47 = vector.load %arg4[%c0_33, %c1, %c0_34, %c0_35] : memref<1x5x2x128xf32, #tpu.memory_space<vmem>>, vector<1x1x2x128xf32>
    %48 = vector.shape_cast %47 : vector<1x1x2x128xf32> to vector<2x128xf32>
    %49 = arith.maximumf %46, %48 : vector<2x128xf32>
    %c0_36 = arith.constant 0 : index
    %c2 = arith.constant 2 : index
    %c0_37 = arith.constant 0 : index
    %c0_38 = arith.constant 0 : index
    %50 = vector.load %arg4[%c0_36, %c2, %c0_37, %c0_38] : memref<1x5x2x128xf32, #tpu.memory_space<vmem>>, vector<1x1x2x128xf32>
    %51 = vector.shape_cast %50 : vector<1x1x2x128xf32> to vector<2x128xf32>
    %52 = arith.maximumf %49, %51 : vector<2x128xf32>
    %c0_39 = arith.constant 0 : index
    %c3 = arith.constant 3 : index
    %c0_40 = arith.constant 0 : index
    %c0_41 = arith.constant 0 : index
    %53 = vector.load %arg4[%c0_39, %c3, %c0_40, %c0_41] : memref<1x5x2x128xf32, #tpu.memory_space<vmem>>, vector<1x1x2x128xf32>
    %54 = vector.shape_cast %53 : vector<1x1x2x128xf32> to vector<2x128xf32>
    %55 = arith.maximumf %52, %54 : vector<2x128xf32>
    %c0_42 = arith.constant 0 : index
    %c4 = arith.constant 4 : index
    %c0_43 = arith.constant 0 : index
    %c0_44 = arith.constant 0 : index
    %56 = vector.load %arg4[%c0_42, %c4, %c0_43, %c0_44] : memref<1x5x2x128xf32, #tpu.memory_space<vmem>>, vector<1x1x2x128xf32>
    %57 = vector.shape_cast %56 : vector<1x1x2x128xf32> to vector<2x128xf32>
    %58 = arith.maximumf %55, %57 : vector<2x128xf32>
    %cst_45 = arith.constant 0.000000e+00 : f32
    %59 = vector.broadcast %cst_45 : f32 to vector<2x128xf32>
    %cst_46 = arith.constant 0.000000e+00 : f32
    %60 = vector.broadcast %cst_46 : f32 to vector<2x128xf32>
    %cst_47 = arith.constant 0.000000e+00 : f32
    %61 = vector.broadcast %cst_47 : f32 to vector<2x128xf32>
    %c0_48 = arith.constant 0 : index
    %c0_49 = arith.constant 0 : index
    %c0_50 = arith.constant 0 : index
    %c0_51 = arith.constant 0 : index
    %62 = vector.load %arg4[%c0_48, %c0_49, %c0_50, %c0_51] : memref<1x5x2x128xf32, #tpu.memory_space<vmem>>, vector<1x1x2x128xf32>
    %63 = vector.shape_cast %62 : vector<1x1x2x128xf32> to vector<2x128xf32>
    %64 = arith.subf %63, %58 : vector<2x128xf32>
    %65 = math.exp %64 : vector<2x128xf32>
    %c0_i32_52 = arith.constant 0 : i32
    %66 = vector.broadcast %c0_i32_52 : i32 to vector<2x128xi32>
    %67 = arith.cmpi eq, %44, %66 : vector<2x128xi32>
    %68 = arith.addf %59, %65 : vector<2x128xf32>
    %cst_53 = arith.constant 0.000000e+00 : f32
    %69 = vector.broadcast %cst_53 : f32 to vector<2x128xf32>
    %70 = arith.select %67, %63, %69 : vector<2x128xi1>, vector<2x128xf32>
    %71 = arith.addf %60, %70 : vector<2x128xf32>
    %c0_54 = arith.constant 0 : index
    %72 = memref.load %arg3[%c0_54] : memref<5xf32, #tpu.memory_space<smem>>
    %cst_55 = arith.constant 0.000000e+00 : f32
    %73 = vector.broadcast %72 : f32 to vector<2x128xf32>
    %74 = vector.broadcast %cst_55 : f32 to vector<2x128xf32>
    %75 = arith.select %67, %73, %74 : vector<2x128xi1>, vector<2x128xf32>
    %76 = arith.addf %61, %75 : vector<2x128xf32>
    %c0_56 = arith.constant 0 : index
    %c1_57 = arith.constant 1 : index
    %c0_58 = arith.constant 0 : index
    %c0_59 = arith.constant 0 : index
    %77 = vector.load %arg4[%c0_56, %c1_57, %c0_58, %c0_59] : memref<1x5x2x128xf32, #tpu.memory_space<vmem>>, vector<1x1x2x128xf32>
    %78 = vector.shape_cast %77 : vector<1x1x2x128xf32> to vector<2x128xf32>
    %79 = arith.subf %78, %58 : vector<2x128xf32>
    %80 = math.exp %79 : vector<2x128xf32>
    %c1_i32_60 = arith.constant 1 : i32
    %81 = vector.broadcast %c1_i32_60 : i32 to vector<2x128xi32>
    %82 = arith.cmpi eq, %44, %81 : vector<2x128xi32>
    %83 = arith.addf %68, %80 : vector<2x128xf32>
    %cst_61 = arith.constant 0.000000e+00 : f32
    %84 = vector.broadcast %cst_61 : f32 to vector<2x128xf32>
    %85 = arith.select %82, %78, %84 : vector<2x128xi1>, vector<2x128xf32>
    %86 = arith.addf %71, %85 : vector<2x128xf32>
    %c1_62 = arith.constant 1 : index
    %87 = memref.load %arg3[%c1_62] : memref<5xf32, #tpu.memory_space<smem>>
    %cst_63 = arith.constant 0.000000e+00 : f32
    %88 = vector.broadcast %87 : f32 to vector<2x128xf32>
    %89 = vector.broadcast %cst_63 : f32 to vector<2x128xf32>
    %90 = arith.select %82, %88, %89 : vector<2x128xi1>, vector<2x128xf32>
    %91 = arith.addf %76, %90 : vector<2x128xf32>
    %c0_64 = arith.constant 0 : index
    %c2_65 = arith.constant 2 : index
    %c0_66 = arith.constant 0 : index
    %c0_67 = arith.constant 0 : index
    %92 = vector.load %arg4[%c0_64, %c2_65, %c0_66, %c0_67] : memref<1x5x2x128xf32, #tpu.memory_space<vmem>>, vector<1x1x2x128xf32>
    %93 = vector.shape_cast %92 : vector<1x1x2x128xf32> to vector<2x128xf32>
    %94 = arith.subf %93, %58 : vector<2x128xf32>
    %95 = math.exp %94 : vector<2x128xf32>
    %c2_i32_68 = arith.constant 2 : i32
    %96 = vector.broadcast %c2_i32_68 : i32 to vector<2x128xi32>
    %97 = arith.cmpi eq, %44, %96 : vector<2x128xi32>
    %98 = arith.addf %83, %95 : vector<2x128xf32>
    %cst_69 = arith.constant 0.000000e+00 : f32
    %99 = vector.broadcast %cst_69 : f32 to vector<2x128xf32>
    %100 = arith.select %97, %93, %99 : vector<2x128xi1>, vector<2x128xf32>
    %101 = arith.addf %86, %100 : vector<2x128xf32>
    %c2_70 = arith.constant 2 : index
    %102 = memref.load %arg3[%c2_70] : memref<5xf32, #tpu.memory_space<smem>>
    %cst_71 = arith.constant 0.000000e+00 : f32
    %103 = vector.broadcast %102 : f32 to vector<2x128xf32>
    %104 = vector.broadcast %cst_71 : f32 to vector<2x128xf32>
    %105 = arith.select %97, %103, %104 : vector<2x128xi1>, vector<2x128xf32>
    %106 = arith.addf %91, %105 : vector<2x128xf32>
    %c0_72 = arith.constant 0 : index
    %c3_73 = arith.constant 3 : index
    %c0_74 = arith.constant 0 : index
    %c0_75 = arith.constant 0 : index
    %107 = vector.load %arg4[%c0_72, %c3_73, %c0_74, %c0_75] : memref<1x5x2x128xf32, #tpu.memory_space<vmem>>, vector<1x1x2x128xf32>
    %108 = vector.shape_cast %107 : vector<1x1x2x128xf32> to vector<2x128xf32>
    %109 = arith.subf %108, %58 : vector<2x128xf32>
    %110 = math.exp %109 : vector<2x128xf32>
    %c3_i32_76 = arith.constant 3 : i32
    %111 = vector.broadcast %c3_i32_76 : i32 to vector<2x128xi32>
    %112 = arith.cmpi eq, %44, %111 : vector<2x128xi32>
    %113 = arith.addf %98, %110 : vector<2x128xf32>
    %cst_77 = arith.constant 0.000000e+00 : f32
    %114 = vector.broadcast %cst_77 : f32 to vector<2x128xf32>
    %115 = arith.select %112, %108, %114 : vector<2x128xi1>, vector<2x128xf32>
    %116 = arith.addf %101, %115 : vector<2x128xf32>
    %c3_78 = arith.constant 3 : index
    %117 = memref.load %arg3[%c3_78] : memref<5xf32, #tpu.memory_space<smem>>
    %cst_79 = arith.constant 0.000000e+00 : f32
    %118 = vector.broadcast %117 : f32 to vector<2x128xf32>
    %119 = vector.broadcast %cst_79 : f32 to vector<2x128xf32>
    %120 = arith.select %112, %118, %119 : vector<2x128xi1>, vector<2x128xf32>
    %121 = arith.addf %106, %120 : vector<2x128xf32>
    %c0_80 = arith.constant 0 : index
    %c4_81 = arith.constant 4 : index
    %c0_82 = arith.constant 0 : index
    %c0_83 = arith.constant 0 : index
    %122 = vector.load %arg4[%c0_80, %c4_81, %c0_82, %c0_83] : memref<1x5x2x128xf32, #tpu.memory_space<vmem>>, vector<1x1x2x128xf32>
    %123 = vector.shape_cast %122 : vector<1x1x2x128xf32> to vector<2x128xf32>
    %124 = arith.subf %123, %58 : vector<2x128xf32>
    %125 = math.exp %124 : vector<2x128xf32>
    %c4_i32_84 = arith.constant 4 : i32
    %126 = vector.broadcast %c4_i32_84 : i32 to vector<2x128xi32>
    %127 = arith.cmpi eq, %44, %126 : vector<2x128xi32>
    %128 = arith.addf %113, %125 : vector<2x128xf32>
    %cst_85 = arith.constant 0.000000e+00 : f32
    %129 = vector.broadcast %cst_85 : f32 to vector<2x128xf32>
    %130 = arith.select %127, %123, %129 : vector<2x128xi1>, vector<2x128xf32>
    %131 = arith.addf %116, %130 : vector<2x128xf32>
    %c4_86 = arith.constant 4 : index
    %132 = memref.load %arg3[%c4_86] : memref<5xf32, #tpu.memory_space<smem>>
    %cst_87 = arith.constant 0.000000e+00 : f32
    %133 = vector.broadcast %132 : f32 to vector<2x128xf32>
    %134 = vector.broadcast %cst_87 : f32 to vector<2x128xf32>
    %135 = arith.select %127, %133, %134 : vector<2x128xi1>, vector<2x128xf32>
    %136 = arith.addf %121, %135 : vector<2x128xf32>
    %137 = math.log %128 : vector<2x128xf32>
    %138 = arith.addf %58, %137 : vector<2x128xf32>
    %139 = arith.subf %138, %131 : vector<2x128xf32>
    %140 = arith.mulf %136, %139 : vector<2x128xf32>
    %c0_88 = arith.constant 0 : index
    %c0_89 = arith.constant 0 : index
    %141 = vector.load %arg11[%c0_88, %c0_89] : memref<2x128xf32, #tpu.memory_space<vmem>>, vector<2x128xf32>
    %142 = arith.addf %141, %140 : vector<2x128xf32>
    %c0_90 = arith.constant 0 : index
    %c0_91 = arith.constant 0 : index
    %143 = vector.load %arg11[%c0_90, %c0_91] : memref<2x128xf32, #tpu.memory_space<vmem>>, vector<2x128xf32>
    tpu.vector_store %arg11[%c0_90, %c0_91], %142 {strides = array<i32>} : memref<2x128xf32, #tpu.memory_space<vmem>>, vector<2x128xf32>,
    %c0_92 = arith.constant 0 : index
    %c0_93 = arith.constant 0 : index
    %144 = vector.load %arg12[%c0_92, %c0_93] : memref<2x128xf32, #tpu.memory_space<vmem>>, vector<2x128xf32>
    %145 = arith.addf %144, %136 : vector<2x128xf32>
    %c0_94 = arith.constant 0 : index
    %c0_95 = arith.constant 0 : index
    %146 = vector.load %arg12[%c0_94, %c0_95] : memref<2x128xf32, #tpu.memory_space<vmem>>, vector<2x128xf32>
    tpu.vector_store %arg12[%c0_94, %c0_95], %145 {strides = array<i32>} : memref<2x128xf32, #tpu.memory_space<vmem>>, vector<2x128xf32>,
    %c0_i32_96 = arith.constant 0 : i32
    %147 = arith.cmpi eq, %arg2, %c0_i32_96 : i32
    %148 = arith.extui %147 : i1 to i32
    %c0_i32_97 = arith.constant 0 : i32
    %149 = arith.cmpi ne, %148, %c0_i32_97 : i32
    scf.if %149 {
      %c0_98 = arith.constant 0 : index
      %c0_99 = arith.constant 0 : index
      %150 = vector.load %arg11[%c0_98, %c0_99] : memref<2x128xf32, #tpu.memory_space<vmem>>, vector<2x128xf32>
      %151 = vector.shape_cast %150 : vector<2x128xf32> to vector<1x2x128xf32>
      %cst_100 = arith.constant dense<0.000000e+00> : vector<1xf32>
      %152 = vector.multi_reduction <add>, %151, %cst_100 [1, 2] : vector<1x2x128xf32> to vector<1xf32>
      %153 = vector.shape_cast %152 : vector<1xf32> to vector<1x1x1xf32>
      %154 = vector.extract %153[0, 0, 0] : f32 from vector<1x1x1xf32>
      %155 = vector.broadcast %154 : f32 to vector<1x1xf32>
      %c0_101 = arith.constant 0 : index
      %c0_102 = arith.constant 0 : index
      %c0_103 = arith.constant 0 : index
      %156 = vector.load %arg9[%c0_101, %c0_102, %c0_103] : memref<1x1x1xf32, #tpu.memory_space<vmem>>, vector<1x1x1xf32>
      %157 = vector.shape_cast %156 : vector<1x1x1xf32> to vector<1x1xf32>
      %158 = vector.shape_cast %155 : vector<1x1xf32> to vector<1x1x1xf32>
      tpu.vector_store %arg9[%c0_101, %c0_102, %c0_103], %158 {strides = array<i32>} : memref<1x1x1xf32, #tpu.memory_space<vmem>>, vector<1x1x1xf32>,
      %c0_104 = arith.constant 0 : index
      %c0_105 = arith.constant 0 : index
      %159 = vector.load %arg12[%c0_104, %c0_105] : memref<2x128xf32, #tpu.memory_space<vmem>>, vector<2x128xf32>
      %160 = vector.shape_cast %159 : vector<2x128xf32> to vector<1x2x128xf32>
      %cst_106 = arith.constant dense<0.000000e+00> : vector<1xf32>
      %161 = vector.multi_reduction <add>, %160, %cst_106 [1, 2] : vector<1x2x128xf32> to vector<1xf32>
      %162 = vector.shape_cast %161 : vector<1xf32> to vector<1x1x1xf32>
      %163 = vector.extract %162[0, 0, 0] : f32 from vector<1x1x1xf32>
      %164 = vector.broadcast %163 : f32 to vector<1x1xf32>
      %c0_107 = arith.constant 0 : index
      %c0_108 = arith.constant 0 : index
      %c0_109 = arith.constant 0 : index
      %165 = vector.load %arg10[%c0_107, %c0_108, %c0_109] : memref<1x1x1xf32, #tpu.memory_space<vmem>>, vector<1x1x1xf32>
      %166 = vector.shape_cast %165 : vector<1x1x1xf32> to vector<1x1xf32>
      %167 = vector.shape_cast %164 : vector<1x1xf32> to vector<1x1x1xf32>
      tpu.vector_store %arg10[%c0_107, %c0_108, %c0_109], %167 {strides = array<i32>} : memref<1x1x1xf32, #tpu.memory_space<vmem>>, vector<1x1x1xf32>,
    } else {
    }
    return
  }
  func.func @transform_0(%arg0: i32, %arg1: i32, %arg2: i32, %arg3: memref<5xf32, #tpu.memory_space<smem>>) -> (i32, i32, i32, i32) {
    %c1_i32 = arith.constant 1 : i32
    %0 = arith.muli %arg1, %c1_i32 : i32
    %1 = arith.addi %0, %arg2 : i32
    %c0_i32 = arith.constant 0 : i32
    %c0_i32_0 = arith.constant 0 : i32
    %c0_i32_1 = arith.constant 0 : i32
    return %arg0, %c0_i32, %1, %c0_i32_0 : i32, i32, i32, i32
  }
  func.func @transform_1(%arg0: i32, %arg1: i32, %arg2: i32, %arg3: memref<5xf32, #tpu.memory_space<smem>>) -> (i32, i32, i32) {
    %c1_i32 = arith.constant 1 : i32
    %0 = arith.muli %arg1, %c1_i32 : i32
    %1 = arith.addi %0, %arg2 : i32
    %c0_i32 = arith.constant 0 : i32
    %c0_i32_0 = arith.constant 0 : i32
    return %arg0, %1, %c0_i32 : i32, i32, i32
  }
  func.func @transform_2(%arg0: i32, %arg1: i32, %arg2: i32, %arg3: memref<5xf32, #tpu.memory_space<smem>>) -> (i32, i32, i32) {
    %c1_i32 = arith.constant 1 : i32
    %0 = arith.muli %arg1, %c1_i32 : i32
    %1 = arith.addi %0, %arg2 : i32
    %c0_i32 = arith.constant 0 : i32
    %c0_i32_0 = arith.constant 0 : i32
    return %arg0, %1, %c0_i32 : i32, i32, i32
  }
  func.func @transform_3(%arg0: i32, %arg1: i32, %arg2: i32, %arg3: memref<5xf32, #tpu.memory_space<smem>>) -> (i32, i32, i32) {
    %c1_i32 = arith.constant 1 : i32
    %0 = arith.muli %arg1, %c1_i32 : i32
    %1 = arith.addi %0, %arg2 : i32
    %c0_i32 = arith.constant 0 : i32
    %c0_i32_0 = arith.constant 0 : i32
    return %arg0, %1, %c0_i32 : i32, i32, i32
  }
  func.func @transform_4(%arg0: i32, %arg1: i32, %arg2: i32, %arg3: memref<5xf32, #tpu.memory_space<smem>>) -> (i32, i32, i32) {
    %c1_i32 = arith.constant 1 : i32
    %0 = arith.muli %arg1, %c1_i32 : i32
    %1 = arith.addi %0, %arg2 : i32
    %c0_i32 = arith.constant 0 : i32
    %c0_i32_0 = arith.constant 0 : i32
    return %arg0, %1, %c0_i32 : i32, i32, i32
  }
  func.func @transform_5(%arg0: i32, %arg1: i32, %arg2: i32, %arg3: memref<5xf32, #tpu.memory_space<smem>>) -> (i32, i32, i32) {
    %c1_i32 = arith.constant 1 : i32
    %0 = arith.muli %arg0, %c1_i32 : i32
    %1 = arith.addi %0, %arg1 : i32
    %c0_i32 = arith.constant 0 : i32
    %c0_i32_0 = arith.constant 0 : i32
    %c0_i32_1 = arith.constant 0 : i32
    return %1, %c0_i32, %c0_i32_0 : i32, i32, i32
  }
  func.func @transform_6(%arg0: i32, %arg1: i32, %arg2: i32, %arg3: memref<5xf32, #tpu.memory_space<smem>>) -> (i32, i32, i32) {
    %c1_i32 = arith.constant 1 : i32
    %0 = arith.muli %arg0, %c1_i32 : i32
    %1 = arith.addi %0, %arg1 : i32
    %c0_i32 = arith.constant 0 : i32
    %c0_i32_0 = arith.constant 0 : i32
    %c0_i32_1 = arith.constant 0 : i32
    return %1, %c0_i32, %c0_i32_0 : i32, i32, i32
  }
}

</mosaic_0001>

<llo_original>
// kernel: tpu_custom_call.1
$region0: #{tpu_custom_call.1}
  #allocation0 [shape = 'u32[]', space=smem, size = 0x4, offset = 0x4, fixed_abs, tag = 'smem constant byte address 0x4 - core index']
  #allocation1 [shape = 'u32[144,128]{1,0:T(1,128)}', space=vmem, size = 0x12000, scoped, tag = 'internal scratch']
  #allocation2 [shape = 'f32[2,128]{1,0:T(2,128)}', space=vmem, size = 0x400, scoped, tag = 'scratch operand']
  #allocation3 [shape = 'f32[2,128]{1,0:T(2,128)}', space=vmem, size = 0x400, scoped, tag = 'scratch operand']
  #allocation4 [shape = 's32[1]{0}', space=sflag, size = 0x4, scoped, tag = 'scoped memory for tpu_custom_call.1']
  #allocation5 [shape = 'u8[512]{0}', space=smem, size = 0x200, scoped, tag = 'prefetched SMEM operand 0']
  %s0 = inlined_call_operand.hbm [shape: f32[5], index: 0, kind: input, shape index: {}]
  %s1 = inlined_call_operand.hbm [shape: f32[2,5,2,128], index: 1, kind: input, shape index: {}]
  %s2 = inlined_call_operand.vmem [shape: f32[2,2,128], index: 2, kind: input, shape index: {}]
  %s3 = inlined_call_operand.vmem [shape: f32[2,2,128], index: 3, kind: input, shape index: {}]
  %s4 = inlined_call_operand.vmem [shape: f32[2,2,128], index: 4, kind: input, shape index: {}]
  %s5 = inlined_call_operand.vmem [shape: f32[2,2,128], index: 5, kind: input, shape index: {}]
  %s6 = inlined_call_operand.vmem [shape: f32[2,1,1], index: 6, kind: output, shape index: {0}]
  %s7 = inlined_call_operand.vmem [shape: f32[2,1,1], index: 7, kind: output, shape index: {1}]
  %8 = xla_tuple %s6, %s7
  %s9 = sld [smem:[#allocation0]]
  $region73: #{tpu_custom_call.1} parent=0
    _
  %s11 = ssub.s32 1, %s9
  %s12 = scalar_select 0, %s11, %s9
  %14 = dma.hbm_to_smem %s0, 16, [#allocation5], [#allocation4]
  %15 = dma.done [#allocation4], 16
  %16 = sfence
  $region1: #{tpu_custom_call.1} parent=0
    #allocation6 [shape = 'u8[10240]{0}', space=vmem, size = 0x2800, scoped, tag = 'input window, operand 1']
    #allocation7 [shape = 's32[2]{0}', space=sflag, size = 0x8, scoped, tag = 'scoped memory for tpu_custom_call.1']
    %17 = vsyncpa [#allocation7], 0
    %s18 = scalar_lea.sflag [#allocation7], 1
    %19 = vsyncpa %s18, 0
    loop: start=0, step=1, limit=4
    $region2: #{tpu_custom_call.1} parent=1 // loop_pre_header
      _
    $region3: #{tpu_custom_call.1} parent=1 // loop_header
      %s21 = sphi 0, %s25
      %p22 = scmp.ge.s32.totalorder %s21, 4
      %s28 = sphi 0, %s47
      %s29 = sphi 0, %s43
      %s30 = sphi 0, %s39
      %s31 = sphi 0, %s28
      %s32 = sphi 0, %s29
      %s33 = sphi 0, %s30
      %s34 = sphi 0, %s31
      %s35 = sphi 0, %s32
      %s36 = sphi 0, %s33
      %s54 = sphi 0, %s56
      %s57 = sphi 0, %s54
      %s58 = sphi 0, %s57
      %s74 = sphi 0, %s58
      %s84 = sphi 0, %s86
      %s87 = sphi 0, %s84
      %s88 = sphi 0, %s87
      %s104 = sphi 0, %s88
      %s114 = sphi 0, %s116
      %s117 = sphi 0, %s114
      %s118 = sphi 0, %s117
      %s134 = sphi 0, %s118
      %s144 = sphi 0, %s146
      %s147 = sphi 0, %s144
      %s148 = sphi 0, %s147
      %s164 = sphi 0, %s148
      %s174 = sphi 0, %s176
      %s177 = sphi 0, %s174
      %s178 = sphi 0, %s177
      %s194 = sphi 0, %s178
      %s202 = sphi 0, %s204
      %s205 = sphi 0, %s202
      %s206 = sphi 0, %s205
      %s222 = sphi 0, %s206
      %s230 = sphi 0, %s232
      %s233 = sphi 0, %s230
      %s234 = sphi 0, %s233
      %s250 = sphi 0, %s234
    $region4: #{tpu_custom_call.1} parent=1 // loop_header_branch
      %24 = sbr.rel (%p22) target = $region8
    $region5: #{tpu_custom_call.1} parent=1 // loop_body
      %s26 = ssub.s32 %s21, 1
      %s27 = ssub.s32 %s21, 2
      %s37 = sadd.s32 1, %s30
      %p38 = scmp.ge.s32.totalorder %s37, 1
      %s39 = scalar_select %p38, 0, %s37
      %s40 = sadd.s32 1, %s29
      %s41 = scalar_select %p38, %s40, %s29
      %p42 = scmp.ge.s32.totalorder %s41, 1
      %s43 = scalar_select %p42, 0, %s41
      %s44 = sadd.s32 1, %s28
      %s45 = scalar_select %p42, %s44, %s28
      %p46 = scmp.ge.s32.totalorder %s45, 2
      %s47 = scalar_select %p46, 0, %s45
      %s48 = sadd.s32 %s29, %s30
      %s49 = sadd.s32 %s43, %s39
      %s50 = ssub.s32 %s28, %s47
      %s51 = ssub.s32 %s48, %s49
      %s52 = sor.u32 %s50, %s51
      %p53 = scmp.eq.s32.totalorder %s52, 0
      %s55 = sadd.s32 %s54, 1
      %s56 = scalar_select %p53, %s54, %s55
      %p59 = pneg %p53
      %p60 = scmp.eq.s32.totalorder %s21, 1
      %p61 = por %p59, %p60
      %p62 = scmp.ne.s32.totalorder %s54, %s57
      %p63 = scmp.eq.s32.totalorder %s21, 0
      %p64 = por %p62, %p63
      %p65 = scmp.ne.s32.totalorder %s54, %s57
      %p66 = scmp.eq.s32.totalorder %s26, 1
      %p67 = por %p65, %p66
      %p68 = scmp.ne.s32.totalorder %s57, %s58
      %p69 = scmp.eq.s32.totalorder %s26, 0
      %p70 = por %p68, %p69
      %p71 = scmp.ne.s32.totalorder %s57, %s58
      %p72 = scmp.eq.s32.totalorder %s27, 1
      %p73 = por %p71, %p72
      %p75 = scmp.ne.s32.totalorder %s58, %s74
      %p76 = scmp.eq.s32.totalorder %s27, 0
      %p77 = por %p75, %p76
      %s78 = sadd.s32 %s29, %s30
      %s79 = sadd.s32 %s43, %s39
      %s80 = ssub.s32 %s28, %s47
      %s81 = ssub.s32 %s78, %s79
      %s82 = sor.u32 %s80, %s81
      %p83 = scmp.eq.s32.totalorder %s82, 0
      %s85 = sadd.s32 %s84, 1
      %s86 = scalar_select %p83, %s84, %s85
      %p89 = pneg %p83
      %p90 = scmp.eq.s32.totalorder %s21, 1
      %p91 = por %p89, %p90
      %p92 = scmp.ne.s32.totalorder %s84, %s87
      %p93 = scmp.eq.s32.totalorder %s21, 0
      %p94 = por %p92, %p93
      %p95 = scmp.ne.s32.totalorder %s84, %s87
      %p96 = scmp.eq.s32.totalorder %s26, 1
      %p97 = por %p95, %p96
      %p98 = scmp.ne.s32.totalorder %s87, %s88
      %p99 = scmp.eq.s32.totalorder %s26, 0
      %p100 = por %p98, %p99
      %p101 = scmp.ne.s32.totalorder %s87, %s88
      %p102 = scmp.eq.s32.totalorder %s27, 1
      %p103 = por %p101, %p102
      %p105 = scmp.ne.s32.totalorder %s88, %s104
      %p106 = scmp.eq.s32.totalorder %s27, 0
      %p107 = por %p105, %p106
      %s108 = sadd.s32 %s29, %s30
      %s109 = sadd.s32 %s43, %s39
      %s110 = ssub.s32 %s28, %s47
      %s111 = ssub.s32 %s108, %s109
      %s112 = sor.u32 %s110, %s111
      %p113 = scmp.eq.s32.totalorder %s112, 0
      %s115 = sadd.s32 %s114, 1
      %s116 = scalar_select %p113, %s114, %s115
      %p119 = pneg %p113
      %p120 = scmp.eq.s32.totalorder %s21, 1
      %p121 = por %p119, %p120
      %p122 = scmp.ne.s32.totalorder %s114, %s117
      %p123 = scmp.eq.s32.totalorder %s21, 0
      %p124 = por %p122, %p123
      %p125 = scmp.ne.s32.totalorder %s114, %s117
      %p126 = scmp.eq.s32.totalorder %s26, 1
      %p127 = por %p125, %p126
      %p128 = scmp.ne.s32.totalorder %s117, %s118
      %p129 = scmp.eq.s32.totalorder %s26, 0
      %p130 = por %p128, %p129
      %p131 = scmp.ne.s32.totalorder %s117, %s118
      %p132 = scmp.eq.s32.totalorder %s27, 1
      %p133 = por %p131, %p132
      %p135 = scmp.ne.s32.totalorder %s118, %s134
      %p136 = scmp.eq.s32.totalorder %s27, 0
      %p137 = por %p135, %p136
      %s138 = sadd.s32 %s29, %s30
      %s139 = sadd.s32 %s43, %s39
      %s140 = ssub.s32 %s28, %s47
      %s141 = ssub.s32 %s138, %s139
      %s142 = sor.u32 %s140, %s141
      %p143 = scmp.eq.s32.totalorder %s142, 0
      %s145 = sadd.s32 %s144, 1
      %s146 = scalar_select %p143, %s144, %s145
      %p149 = pneg %p143
      %p150 = scmp.eq.s32.totalorder %s21, 1
      %p151 = por %p149, %p150
      %p152 = scmp.ne.s32.totalorder %s144, %s147
      %p153 = scmp.eq.s32.totalorder %s21, 0
      %p154 = por %p152, %p153
      %p155 = scmp.ne.s32.totalorder %s144, %s147
      %p156 = scmp.eq.s32.totalorder %s26, 1
      %p157 = por %p155, %p156
      %p158 = scmp.ne.s32.totalorder %s147, %s148
      %p159 = scmp.eq.s32.totalorder %s26, 0
      %p160 = por %p158, %p159
      %p161 = scmp.ne.s32.totalorder %s147, %s148
      %p162 = scmp.eq.s32.totalorder %s27, 1
      %p163 = por %p161, %p162
      %p165 = scmp.ne.s32.totalorder %s148, %s164
      %p166 = scmp.eq.s32.totalorder %s27, 0
      %p167 = por %p165, %p166
      %s168 = sadd.s32 %s29, %s30
      %s169 = sadd.s32 %s43, %s39
      %s170 = ssub.s32 %s28, %s47
      %s171 = ssub.s32 %s168, %s169
      %s172 = sor.u32 %s170, %s171
      %p173 = scmp.eq.s32.totalorder %s172, 0
      %s175 = sadd.s32 %s174, 1
      %s176 = scalar_select %p173, %s174, %s175
      %p179 = pneg %p173
      %p180 = scmp.eq.s32.totalorder %s21, 1
      %p181 = por %p179, %p180
      %p182 = scmp.ne.s32.totalorder %s174, %s177
      %p183 = scmp.eq.s32.totalorder %s21, 0
      %p184 = por %p182, %p183
      %p185 = scmp.ne.s32.totalorder %s174, %s177
      %p186 = scmp.eq.s32.totalorder %s26, 1
      %p187 = por %p185, %p186
      %p188 = scmp.ne.s32.totalorder %s177, %s178
      %p189 = scmp.eq.s32.totalorder %s26, 0
      %p190 = por %p188, %p189
      %p191 = scmp.ne.s32.totalorder %s177, %s178
      %p192 = scmp.eq.s32.totalorder %s27, 1
      %p193 = por %p191, %p192
      %p195 = scmp.ne.s32.totalorder %s178, %s194
      %p196 = scmp.eq.s32.totalorder %s27, 0
      %p197 = por %p195, %p196
      %s198 = sadd.s32 %s28, %s29
      %s199 = sadd.s32 %s47, %s43
      %s200 = ssub.s32 %s198, %s199
      %p201 = scmp.eq.s32.totalorder %s200, 0
      %s203 = sadd.s32 %s202, 1
      %s204 = scalar_select %p201, %s202, %s203
      %p207 = pneg %p201
      %p208 = scmp.eq.s32.totalorder %s21, 1
      %p209 = por %p207, %p208
      %p210 = scmp.ne.s32.totalorder %s202, %s205
      %p211 = scmp.eq.s32.totalorder %s21, 0
      %p212 = por %p210, %p211
      %p213 = scmp.ne.s32.totalorder %s202, %s205
      %p214 = scmp.eq.s32.totalorder %s26, 1
      %p215 = por %p213, %p214
      %p216 = scmp.ne.s32.totalorder %s205, %s206
      %p217 = scmp.eq.s32.totalorder %s26, 0
      %p218 = por %p216, %p217
      %p219 = scmp.ne.s32.totalorder %s205, %s206
      %p220 = scmp.eq.s32.totalorder %s27, 1
      %p221 = por %p219, %p220
      %p223 = scmp.ne.s32.totalorder %s206, %s222
      %p224 = scmp.eq.s32.totalorder %s27, 0
      %p225 = por %p223, %p224
      %s226 = sadd.s32 %s28, %s29
      %s227 = sadd.s32 %s47, %s43
      %s228 = ssub.s32 %s226, %s227
      %p229 = scmp.eq.s32.totalorder %s228, 0
      %s231 = sadd.s32 %s230, 1
      %s232 = scalar_select %p229, %s230, %s231
      %p235 = pneg %p229
      %p236 = scmp.eq.s32.totalorder %s21, 1
      %p237 = por %p235, %p236
      %p238 = scmp.ne.s32.totalorder %s230, %s233
      %p239 = scmp.eq.s32.totalorder %s21, 0
      %p240 = por %p238, %p239
      %p241 = scmp.ne.s32.totalorder %s230, %s233
      %p242 = scmp.eq.s32.totalorder %s26, 1
      %p243 = por %p241, %p242
      %p244 = scmp.ne.s32.totalorder %s233, %s234
      %p245 = scmp.eq.s32.totalorder %s26, 0
      %p246 = por %p244, %p245
      %p247 = scmp.ne.s32.totalorder %s233, %s234
      %p248 = scmp.eq.s32.totalorder %s27, 1
      %p249 = por %p247, %p248
      %p251 = scmp.ne.s32.totalorder %s234, %s250
      %p252 = scmp.eq.s32.totalorder %s27, 0
      %p253 = por %p251, %p252
      %p254 = scmp.le.s32.totalorder 1, %s21
      %p255 = scmp.lt.s32.totalorder %s21, 3
      %p256 = pnand %p254, %p255
      %p257 = pneg %p256
      // Predicated region
      $region9: #{tpu_custom_call.1} parent=5 // pred_check
        _
      $region10: #{tpu_custom_call.1} parent=5 // pred_check_branch
        %259 = sbr.rel (%p256) target = $region12
      $region11: #{tpu_custom_call.1} parent=5 // pred_region
        %s260 = ssub.s32 %s21, 1
      $region12: #{tpu_custom_call.1} parent=5 // pred_fallthru
        _
      %p261 = scmp.lt.s32.totalorder %s21, 2
      // Predicated region
      $region13: #{tpu_custom_call.1} parent=5 // pred_check
        %p262 = pneg %p261
      $region14: #{tpu_custom_call.1} parent=5 // pred_check_branch
        %264 = sbr.rel (%p262) target = $region16
      $region15: #{tpu_custom_call.1} parent=5 // pred_region
        // Predicated region
        $region17: #{tpu_custom_call.1} parent=15 // pred_check
          %p265 = pneg %p64
        $region18: #{tpu_custom_call.1} parent=15 // pred_check_branch
          %267 = sbr.rel (%p265) target = $region20
        $region19: #{tpu_custom_call.1} parent=15 // pred_region
          %s268 = sand.u32 %s54, 1
          %s269 = scalar_lea.sflag [#allocation7], %s268
          %s270 = sand.u32 %s54, 1
          %s271 = smul.addr %s270, 10
          %s272 = scalar_lea.vmem [#allocation6], %s271
          %s273 = sadd.s32 %s29, %s30
          %s275 = ssub.s32 160, 160
          %276 = vsyncadd %s269, %s275
          %s277 = smul.addr %s28, 5
          %s278 = sadd.s32 %s273, %s277
          %s279 = smul.addr %s278, 32
          %s280 = scalar_lea.hbm %s1, %s279
          %s281 = sshll.u32 %s272, 4
          %s282 = int_to_ptr.vmem [resolvable:$true] %s281
          %287 = dma.hbm_to_vmem [thread:$0]  %s280, 160, %s282, %s269, 32, 32, 2
        $region20: #{tpu_custom_call.1} parent=15 // pred_fallthru
          _
        // Predicated region
        $region21: #{tpu_custom_call.1} parent=15 // pred_check
          %p288 = pneg %p94
        $region22: #{tpu_custom_call.1} parent=15 // pred_check_branch
          %290 = sbr.rel (%p288) target = $region24
        $region23: #{tpu_custom_call.1} parent=15 // pred_region
          %s291 = sadd.s32 %s29, %s30
          %p292 = scmp.lt.s32.totalorder %s28, 1
          %s293 = scalar_select %p292, %s28, 1
          %p294 = scmp.lt.s32.totalorder %s291, 0
          %s295 = scalar_select %p294, %s291, 0
          %s296 = sadd.s32 %s295, %s293
          %s297 = smul.addr %s296, 2
          %s298 = scalar_lea.vmem %s2, %s297
          %s299 = sadd.s32 %s29, %s30
        $region24: #{tpu_custom_call.1} parent=15 // pred_fallthru
          _
        // Predicated region
        $region25: #{tpu_custom_call.1} parent=15 // pred_check
          %p300 = pneg %p124
        $region26: #{tpu_custom_call.1} parent=15 // pred_check_branch
          %302 = sbr.rel (%p300) target = $region28
        $region27: #{tpu_custom_call.1} parent=15 // pred_region
          %s303 = sadd.s32 %s29, %s30
          %p304 = scmp.lt.s32.totalorder %s28, 1
          %s305 = scalar_select %p304, %s28, 1
          %p306 = scmp.lt.s32.totalorder %s303, 0
          %s307 = scalar_select %p306, %s303, 0
          %s308 = sadd.s32 %s307, %s305
          %s309 = smul.addr %s308, 2
          %s310 = scalar_lea.vmem %s3, %s309
          %s311 = sadd.s32 %s29, %s30
        $region28: #{tpu_custom_call.1} parent=15 // pred_fallthru
          _
        // Predicated region
        $region29: #{tpu_custom_call.1} parent=15 // pred_check
          %p312 = pneg %p154
        $region30: #{tpu_custom_call.1} parent=15 // pred_check_branch
          %314 = sbr.rel (%p312) target = $region32
        $region31: #{tpu_custom_call.1} parent=15 // pred_region
          %s315 = sadd.s32 %s29, %s30
          %p316 = scmp.lt.s32.totalorder %s28, 1
          %s317 = scalar_select %p316, %s28, 1
          %p318 = scmp.lt.s32.totalorder %s315, 0
          %s319 = scalar_select %p318, %s315, 0
          %s320 = sadd.s32 %s319, %s317
          %s321 = smul.addr %s320, 2
          %s322 = scalar_lea.vmem %s4, %s321
          %s323 = sadd.s32 %s29, %s30
        $region32: #{tpu_custom_call.1} parent=15 // pred_fallthru
          _
        // Predicated region
        $region33: #{tpu_custom_call.1} parent=15 // pred_check
          %p324 = pneg %p184
        $region34: #{tpu_custom_call.1} parent=15 // pred_check_branch
          %326 = sbr.rel (%p324) target = $region36
        $region35: #{tpu_custom_call.1} parent=15 // pred_region
          %s327 = sadd.s32 %s29, %s30
          %p328 = scmp.lt.s32.totalorder %s28, 1
          %s329 = scalar_select %p328, %s28, 1
          %p330 = scmp.lt.s32.totalorder %s327, 0
          %s331 = scalar_select %p330, %s327, 0
          %s332 = sadd.s32 %s331, %s329
          %s333 = smul.addr %s332, 2
          %s334 = scalar_lea.vmem %s5, %s333
          %s335 = sadd.s32 %s29, %s30
        $region36: #{tpu_custom_call.1} parent=15 // pred_fallthru
          _
      $region16: #{tpu_custom_call.1} parent=5 // pred_fallthru
        _
      %p336 = scmp.le.s32.totalorder 1, %s21
      %p337 = scmp.lt.s32.totalorder %s21, 3
      %p338 = pnand %p336, %p337
      %p339 = pneg %p338
      // Predicated region
      $region37: #{tpu_custom_call.1} parent=5 // pred_check
        _
      $region38: #{tpu_custom_call.1} parent=5 // pred_check_branch
        %341 = sbr.rel (%p338) target = $region40
      $region39: #{tpu_custom_call.1} parent=5 // pred_region
        %s342 = ssub.s32 %s21, 1
        %s343 = sand.u32 %s57, 1
        %s344 = scalar_lea.sflag [#allocation7], %s343
        %s345 = sand.u32 %s57, 1
        %s346 = smul.addr %s345, 10
        %s347 = scalar_lea.vmem [#allocation6], %s346
        // Predicated region
        $region41: #{tpu_custom_call.1} parent=39 // pred_check
          %p348 = pneg %p70
        $region42: #{tpu_custom_call.1} parent=39 // pred_check_branch
          %350 = sbr.rel (%p348) target = $region44
        $region43: #{tpu_custom_call.1} parent=39 // pred_region
          %351 = dma.done %s344, 160
        $region44: #{tpu_custom_call.1} parent=39 // pred_fallthru
          _
        %s352 = sand.u32 %s57, 1
        %s353 = scalar_lea.sflag [#allocation7], %s352
        %s354 = sand.u32 %s57, 1
        %s355 = smul.addr %s354, 10
        %s356 = scalar_lea.vmem [#allocation6], %s355
        %p357 = pneg %p70
        %p358 = pneg %p67
        %s359 = sadd.s32 %s32, %s33
        %p360 = scmp.lt.s32.totalorder %s31, 1
        %s361 = scalar_select %p360, %s31, 1
        %p362 = scmp.lt.s32.totalorder %s359, 0
        %s363 = scalar_select %p362, %s359, 0
        %s364 = sadd.s32 %s363, %s361
        %s365 = smul.addr %s364, 2
        %s366 = scalar_lea.vmem %s2, %s365
        %p367 = pneg %p100
        %p368 = pneg %p97
        %s369 = sadd.s32 %s32, %s33
        %p370 = scmp.lt.s32.totalorder %s31, 1
        %s371 = scalar_select %p370, %s31, 1
        %p372 = scmp.lt.s32.totalorder %s369, 0
        %s373 = scalar_select %p372, %s369, 0
        %s374 = sadd.s32 %s373, %s371
        %s375 = smul.addr %s374, 2
        %s376 = scalar_lea.vmem %s3, %s375
        %p377 = pneg %p130
        %p378 = pneg %p127
        %s379 = sadd.s32 %s32, %s33
        %p380 = scmp.lt.s32.totalorder %s31, 1
        %s381 = scalar_select %p380, %s31, 1
        %p382 = scmp.lt.s32.totalorder %s379, 0
        %s383 = scalar_select %p382, %s379, 0
        %s384 = sadd.s32 %s383, %s381
        %s385 = smul.addr %s384, 2
        %s386 = scalar_lea.vmem %s4, %s385
        %p387 = pneg %p160
        %p388 = pneg %p157
        %s389 = sadd.s32 %s32, %s33
        %p390 = scmp.lt.s32.totalorder %s31, 1
        %s391 = scalar_select %p390, %s31, 1
        %p392 = scmp.lt.s32.totalorder %s389, 0
        %s393 = scalar_select %p392, %s389, 0
        %s394 = sadd.s32 %s393, %s391
        %s395 = smul.addr %s394, 2
        %s396 = scalar_lea.vmem %s5, %s395
        %p397 = pneg %p190
        %p398 = pneg %p187
        %p399 = pneg %p218
        %p400 = pneg %p215
        %s401 = sadd.s32 %s31, %s32
        %p402 = scmp.lt.s32.totalorder %s401, 1
        %s403 = scalar_select %p402, %s401, 1
        %s404 = scalar_lea.vmem %s6, %s403
        %p405 = pneg %p246
        %p406 = pneg %p243
        %s407 = sadd.s32 %s31, %s32
        %p408 = scmp.lt.s32.totalorder %s407, 1
        %s409 = scalar_select %p408, %s407, 1
        %s410 = scalar_lea.vmem %s7, %s409
        %s411 = sadd.s32 %s32, %s33
        %s412 = sadd.s32 %s32, %s33
        %p413 = scmp.lt.s32.totalorder %s31, 1
        %s414 = scalar_select %p413, %s31, 1
        %p415 = scmp.lt.s32.totalorder %s412, 0
        %s416 = scalar_select %p415, %s412, 0
        %s417 = sadd.s32 %s416, %s414
        %s418 = smul.addr %s417, 2
        %s419 = scalar_lea.vmem %s2, %s418
        %s420 = sadd.s32 %s32, %s33
        %s421 = sadd.s32 %s32, %s33
        %p422 = scmp.lt.s32.totalorder %s31, 1
        %s423 = scalar_select %p422, %s31, 1
        %p424 = scmp.lt.s32.totalorder %s421, 0
        %s425 = scalar_select %p424, %s421, 0
        %s426 = sadd.s32 %s425, %s423
        %s427 = smul.addr %s426, 2
        %s428 = scalar_lea.vmem %s3, %s427
        %s429 = sadd.s32 %s32, %s33
        %s430 = sadd.s32 %s32, %s33
        %p431 = scmp.lt.s32.totalorder %s31, 1
        %s432 = scalar_select %p431, %s31, 1
        %p433 = scmp.lt.s32.totalorder %s430, 0
        %s434 = scalar_select %p433, %s430, 0
        %s435 = sadd.s32 %s434, %s432
        %s436 = smul.addr %s435, 2
        %s437 = scalar_lea.vmem %s4, %s436
        %s438 = sadd.s32 %s32, %s33
        %s439 = sadd.s32 %s32, %s33
        %p440 = scmp.lt.s32.totalorder %s31, 1
        %s441 = scalar_select %p440, %s31, 1
        %p442 = scmp.lt.s32.totalorder %s439, 0
        %s443 = scalar_select %p442, %s439, 0
        %s444 = sadd.s32 %s443, %s441
        %s445 = smul.addr %s444, 2
        %s446 = scalar_lea.vmem %s5, %s445
        %s447 = sadd.s32 %s32, %s33
        %s448 = sadd.s32 %s31, %s32
        %p449 = scmp.lt.s32.totalorder %s448, 1
        %s450 = scalar_select %p449, %s448, 1
        %s451 = scalar_lea.vmem %s6, %s450
        %s452 = sadd.s32 %s31, %s32
        %s453 = sadd.s32 %s31, %s32
        %p454 = scmp.lt.s32.totalorder %s453, 1
        %s455 = scalar_select %p454, %s453, 1
        %s456 = scalar_lea.vmem %s7, %s455
        %s457 = sadd.s32 %s31, %s32
        %p458 = scmp.eq.s32.totalorder %s33, 0
        // Predicated region
        $region45: #{tpu_custom_call.1} parent=39 // pred_check
          %p459 = pneg %p458
        $region46: #{tpu_custom_call.1} parent=39 // pred_check_branch
          %461 = sbr.rel (%p459) target = $region48
        $region47: #{tpu_custom_call.1} parent=39 // pred_region
          %462 = vst [vmem:[#allocation2] sm:$0x3] 0.0
          %463 = vst [vmem:[#allocation3] sm:$0x3] 0.0
        $region48: #{tpu_custom_call.1} parent=39 // pred_fallthru
          _
        %v464 = vld [vmem:[%s419] sm:$0x3]
        %v465 = vmax.f32 %v464, 1.0
        %v466 = vld [vmem:[%s428] sm:$0x3]
        %v467 = vmax.f32 %v465, %v466
        %v468 = vld [vmem:[%s437] sm:$0x3]
        %v469 = vmax.f32 %v467, %v468
        %v470 = vld [vmem:[%s446] sm:$0x3]
        %v471 = vmax.f32 %v469, %v470
        %vm472 = vcmp.eq.f32.partialorder %v464, %v471
        %v473 = vsel %vm472, 1, 0
        %v474 = vsel %vm472, %v473, 0
        %vm475 = vcmp.eq.f32.partialorder %v466, %v471
        %v476 = vsel %vm475, 2, 0
        %vm477 = vcmp.gt.s32.totalorder %v474, %v476
        %v478 = vsel %vm477, %v474, %v476
        %vm479 = vcmp.eq.f32.partialorder %v468, %v471
        %v480 = vsel %vm479, 3, 0
        %vm481 = vcmp.gt.s32.totalorder %v478, %v480
        %v482 = vsel %vm481, %v478, %v480
        %vm483 = vcmp.eq.f32.partialorder %v470, %v471
        %v484 = vsel %vm483, 4, 0
        %vm485 = vcmp.gt.s32.totalorder %v482, %v484
        %v486 = vsel %vm485, %v482, %v484
        %v487 = vld [vmem:[%s347] sm:$0x3]
        %s488 = scalar_lea.vmem %s347, 2 [#allocation6]
        %v489 = vld [vmem:[%s488] sm:$0x3]
        %v490 = vmax.f32 %v487, %v489
        %s491 = scalar_lea.vmem %s347, 4 [#allocation6]
        %v492 = vld [vmem:[%s491] sm:$0x3]
        %v493 = vmax.f32 %v490, %v492
        %s494 = scalar_lea.vmem %s347, 6 [#allocation6]
        %v495 = vld [vmem:[%s494] sm:$0x3]
        %v496 = vmax.f32 %v493, %v495
        %s497 = scalar_lea.vmem %s347, 8 [#allocation6]
        %v498 = vld [vmem:[%s497] sm:$0x3]
        %v499 = vmax.f32 %v496, %v498
        %v500 = vsub.f32 %v487, %v499
        %v501 = vmul.f32 %v500, 1.442695
        %v502 = vpow.pop %v501
        %vm503 = vcmp.eq.s32.totalorder %v486, 0
        %v504 = vadd.f32 %v502, 0.0
        %v505 = vsel %vm503, %v487, 0.0
        %v506 = vadd.f32 %v505, 0.0
        %s507 = sld [smem:[#allocation5]]
        %v508 = vstv %s507
        %v509 = vsel %vm503, %v508, 0.0
        %v510 = vadd.f32 %v509, 0.0
        %v511 = vsub.f32 %v489, %v499
        %v512 = vmul.f32 %v511, 1.442695
        %v513 = vpow.pop %v512
        %vm514 = vcmp.eq.s32.totalorder %v486, 1
        %v515 = vadd.f32 %v504, %v513
        %v516 = vsel %vm514, %v489, 0.0
        %v517 = vadd.f32 %v506, %v516
        %s518 = sld [smem:[#allocation5 + $0x1]]
        %v519 = vstv %s518
        %v520 = vsel %vm514, %v519, 0.0
        %v521 = vadd.f32 %v510, %v520
        %v522 = vsub.f32 %v492, %v499
        %v523 = vmul.f32 %v522, 1.442695
        %v524 = vpow.pop %v523
        %vm525 = vcmp.eq.s32.totalorder %v486, 2
        %v526 = vadd.f32 %v515, %v524
        %v527 = vsel %vm525, %v492, 0.0
        %v528 = vadd.f32 %v517, %v527
        %s529 = sld [smem:[#allocation5 + $0x2]]
        %v530 = vstv %s529
        %v531 = vsel %vm525, %v530, 0.0
        %v532 = vadd.f32 %v521, %v531
        %v533 = vsub.f32 %v495, %v499
        %v534 = vmul.f32 %v533, 1.442695
        %v535 = vpow.pop %v534
        %vm536 = vcmp.eq.s32.totalorder %v486, 3
        %v537 = vadd.f32 %v526, %v535
        %v538 = vsel %vm536, %v495, 0.0
        %v539 = vadd.f32 %v528, %v538
        %s540 = sld [smem:[#allocation5 + $0x3]]
        %v541 = vstv %s540
        %v542 = vsel %vm536, %v541, 0.0
        %v543 = vadd.f32 %v532, %v542
        %v544 = vsub.f32 %v498, %v499
        %v545 = vmul.f32 %v544, 1.442695
        %v546 = vpow.pop %v545
        %vm547 = vcmp.eq.s32.totalorder %v486, 4
        %v548 = vadd.f32 %v537, %v546
        %v549 = vsel %vm547, %v498, 0.0
        %v550 = vadd.f32 %v539, %v549
        %s551 = sld [smem:[#allocation5 + $0x4]]
        %v552 = vstv %s551
        %v553 = vsel %vm547, %v552, 0.0
        %v554 = vadd.f32 %v543, %v553
        %v555 = vlog2.pop %v548
        %v556 = vmul.f32 %v555, 0.6931472
        %v557 = vadd.f32 %v499, %v556
        %v558 = vsub.f32 %v557, %v550
        %v559 = vmul.f32 %v554, %v558
        %v560 = vld [vmem:[#allocation2] sm:$0x3]
        %v561 = vadd.f32 %v560, %v559
        %562 = vst [vmem:[#allocation2] sm:$0x3] %v561
        %v563 = vld [vmem:[#allocation3] sm:$0x3]
        %v564 = vadd.f32 %v563, %v554
        %565 = vst [vmem:[#allocation3] sm:$0x3] %v564
        // Predicated region
        $region49: #{tpu_custom_call.1} parent=39 // pred_check
          %p566 = pneg %p458
        $region50: #{tpu_custom_call.1} parent=39 // pred_check_branch
          %568 = sbr.rel (%p566) target = $region52
        $region51: #{tpu_custom_call.1} parent=39 // pred_region
          %v569 = vld [vmem:[#allocation2] sm:$0x3]
          %vm570 = vcmask 1041408
          %v571 = vsel %vm570, %v569, 0.0
          %572 = vadd.xlane.f32.xlu0 %v571
          %v573 = vpop.xlane.xlu0 %572
          %v574 = vrot.slane %v573, 4
          %v575 = vadd.f32 %v573, %v574
          %v576 = vrot.slane %v575, 2
          %v577 = vadd.f32 %v575, %v576
          %v578 = vrot.slane %v577, 1
          %v579 = vadd.f32 %v577, %v578
          %s580 = vtos %v579
          %v581 = vstv %s580
          %vm582 = vcmask 0
          %583 = vst.msk [vmem:[%s451] sm:$0x1] %vm582, %v581
          %v584 = vld [vmem:[#allocation3] sm:$0x3]
          %v585 = vsel %vm570, %v584, 0.0
          %586 = vadd.xlane.f32.xlu0 %v585
          %v587 = vpop.xlane.xlu0 %586
          %v588 = vrot.slane %v587, 4
          %v589 = vadd.f32 %v587, %v588
          %v590 = vrot.slane %v589, 2
          %v591 = vadd.f32 %v589, %v590
          %v592 = vrot.slane %v591, 1
          %v593 = vadd.f32 %v591, %v592
          %s594 = vtos %v593
          %v595 = vstv %s594
          %596 = vst.msk [vmem:[%s456] sm:$0x1] %vm582, %v595
        $region52: #{tpu_custom_call.1} parent=39 // pred_fallthru
          _
        %s597 = sadd.s32 %s31, %s32
        %p598 = scmp.lt.s32.totalorder %s597, 1
        %s599 = scalar_select %p598, %s597, 1
        %s600 = scalar_lea.vmem %s6, %s599
        %s601 = sadd.s32 %s31, %s32
        %p602 = scmp.lt.s32.totalorder %s601, 1
        %s603 = scalar_select %p602, %s601, 1
        %s604 = scalar_lea.vmem %s7, %s603
        // Predicated region
        $region53: #{tpu_custom_call.1} parent=39 // pred_check
          %p605 = pneg %p215
        $region54: #{tpu_custom_call.1} parent=39 // pred_check_branch
          %607 = sbr.rel (%p605) target = $region56
        $region55: #{tpu_custom_call.1} parent=39 // pred_region
          %s608 = sadd.s32 %s31, %s32
        $region56: #{tpu_custom_call.1} parent=39 // pred_fallthru
          _
        // Predicated region
        $region57: #{tpu_custom_call.1} parent=39 // pred_check
          %p609 = pneg %p243
        $region58: #{tpu_custom_call.1} parent=39 // pred_check_branch
          %611 = sbr.rel (%p609) target = $region60
        $region59: #{tpu_custom_call.1} parent=39 // pred_region
          %s612 = sadd.s32 %s31, %s32
        $region60: #{tpu_custom_call.1} parent=39 // pred_fallthru
          _
      $region40: #{tpu_custom_call.1} parent=5 // pred_fallthru
        _
      %p613 = scmp.le.s32.totalorder 2, %s21
      // Predicated region
      $region61: #{tpu_custom_call.1} parent=5 // pred_check
        %p614 = pneg %p613
      $region62: #{tpu_custom_call.1} parent=5 // pred_check_branch
        %616 = sbr.rel (%p614) target = $region64
      $region63: #{tpu_custom_call.1} parent=5 // pred_region
        %s617 = ssub.s32 %s21, 2
        // Predicated region
        $region65: #{tpu_custom_call.1} parent=63 // pred_check
          %p618 = pneg %p221
        $region66: #{tpu_custom_call.1} parent=63 // pred_check_branch
          %620 = sbr.rel (%p618) target = $region68
        $region67: #{tpu_custom_call.1} parent=63 // pred_region
          %s621 = sadd.s32 %s34, %s35
          %p622 = scmp.lt.s32.totalorder %s621, 1
          %s623 = scalar_select %p622, %s621, 1
          %s624 = scalar_lea.vmem %s6, %s623
        $region68: #{tpu_custom_call.1} parent=63 // pred_fallthru
          _
        // Predicated region
        $region69: #{tpu_custom_call.1} parent=63 // pred_check
          %p625 = pneg %p249
        $region70: #{tpu_custom_call.1} parent=63 // pred_check_branch
          %627 = sbr.rel (%p625) target = $region72
        $region71: #{tpu_custom_call.1} parent=63 // pred_region
          %s628 = sadd.s32 %s34, %s35
          %p629 = scmp.lt.s32.totalorder %s628, 1
          %s630 = scalar_select %p629, %s628, 1
          %s631 = scalar_lea.vmem %s7, %s630
        $region72: #{tpu_custom_call.1} parent=63 // pred_fallthru
          _
      $region64: #{tpu_custom_call.1} parent=5 // pred_fallthru
        _
    $region6: #{tpu_custom_call.1} parent=1 // loop_footer
      %s25 = sadd.s32 1, %s21
    $region7: #{tpu_custom_call.1} parent=1 // loop_footer_branch
      %20 = sbr.rel target = $region3
    $region8: #{tpu_custom_call.1} parent=1 // loop_exit
      _
    %632 = vsyncpa [#allocation7], 1
    %s633 = scalar_lea.sflag [#allocation7], 1
    %634 = vsyncpa %s633, 1

</llo_original>
